<compile_context>
chip_gen: v7x
topology: tpu7x:2x2x1
jax: 0.10.0
libtpu: 0.0.40
codegen_flags: <defaults>
</compile_context>

<pallas_src>
import functools

import jax
import jax.numpy as jnp
from jax.experimental import pallas as pl
from jax.experimental.pallas import tpu as pltpu


def _round_up(x, m):
    return ((x + m - 1) // m) * m


def _decoder_kernel(x_ref,
                    w1_ref, b1_ref,
                    w2_ref, b2_ref,
                    w34_ref, b34_ref,
                    mu_ref, lv_ref,
                    *, output_dim):
    # layer 1: latent_dim -> 128, relu
    h1 = jnp.dot(x_ref[...], w1_ref[...], preferred_element_type=jnp.float32)
    h1 = jnp.maximum(h1 + b1_ref[...], 0.0)

    # layer 2: 128 -> 256, relu
    h2 = jnp.dot(h1, w2_ref[...], preferred_element_type=jnp.float32)
    h2 = jnp.maximum(h2 + b2_ref[...], 0.0)

    # fused heads: 256 -> 2*output_dim   (mu || log_var), one MXU pass
    out = jnp.dot(h2, w34_ref[...], preferred_element_type=jnp.float32) + b34_ref[...]

    # slice in-register, store two narrow (true-width) outputs -> minimal HBM writeback
    mu_ref[...] = out[:, :output_dim].astype(mu_ref.dtype)
    lv_ref[...] = out[:, output_dim:].astype(lv_ref.dtype)


@functools.partial(jax.jit, static_argnames=("tile_b",))
def variational_decoder_forward(x, prepared, *, tile_b=4096):
    """x: [batch, latent_dim] f32.  prepared: dict from prepare_decoder_params().

    Returns (mu, log_var), each [batch, output_dim] f32.
    """
    batch, latent_dim = x.shape
    hidden1 = prepared["w1"].shape[1]       # 128
    hidden2 = prepared["w2"].shape[1]       # 256
    head_dim = prepared["w34"].shape[1]     # 2 * output_dim
    output_dim = head_dim // 2

    # ---- batch tiling: tile_b rows per grid step (multiple of 8); partial last block
    #      is masked by Pallas (no explicit padding of x or the outputs). ----
    tb = min(tile_b, _round_up(batch, 8))
    tb = _round_up(tb, 8)
    # v7x megacore: guarantee >=2 grid steps when the batch is large enough to split.
    if batch > 8 and pl.cdiv(batch, tb) < 2:
        tb = _round_up(pl.cdiv(batch, 2), 8)
    num_tiles = pl.cdiv(batch, tb)

    # Resident specs for weights/biases (same block every grid step -> no re-DMA).
    def resident(shape):
        return pl.BlockSpec(shape, lambda i: (0, 0))

    in_specs = [
        pl.BlockSpec((tb, latent_dim), lambda i: (i, 0)),       # x: streamed over batch
        resident((latent_dim, hidden1)), resident((1, hidden1)),
        resident((hidden1, hidden2)),    resident((1, hidden2)),
        resident((hidden2, head_dim)),   resident((1, head_dim)),
    ]
    out_specs = (
        pl.BlockSpec((tb, output_dim), lambda i: (i, 0)),        # mu
        pl.BlockSpec((tb, output_dim), lambda i: (i, 0)),        # log_var
    )
    out_shape = (
        jax.ShapeDtypeStruct((batch, output_dim), jnp.float32),
        jax.ShapeDtypeStruct((batch, output_dim), jnp.float32),
    )

    flops = 2 * batch * (latent_dim * hidden1
                         + hidden1 * hidden2
                         + hidden2 * head_dim)
    bytes_accessed = 4 * (batch * latent_dim                     # x
                          + latent_dim * hidden1 + hidden1       # w1, b1
                          + hidden1 * hidden2 + hidden2          # w2, b2
                          + hidden2 * head_dim + head_dim        # w34, b34
                          + batch * head_dim)                    # mu + log_var

    mu, log_var = pl.pallas_call(
        functools.partial(_decoder_kernel, output_dim=output_dim),
        out_shape=out_shape,
        grid_spec=pltpu.PrefetchScalarGridSpec(
            num_scalar_prefetch=0,
            grid=(num_tiles,),
            in_specs=in_specs,
            out_specs=out_specs,
        ),
        compiler_params=pltpu.CompilerParams(
            dimension_semantics=("parallel",),        # megacore split on v7x, harmless elsewhere
            vmem_limit_bytes=32 * 1024 * 1024,        # portable across v5e/v6e/v7x
        ),
        cost_estimate=pl.CostEstimate(
            flops=flops, transcendentals=0, bytes_accessed=bytes_accessed),
    )(x, prepared["w1"], prepared["b1"],
      prepared["w2"], prepared["b2"],
      prepared["w34"], prepared["b34"])

    return mu, log_var


def prepare_decoder_params(params):
    """One-time (outside jit) fusion of the mu/log_var heads into a single weight.

    Returns {w1, b1, w2, b2, w34, b34} with weights pre-transposed to [in, out].
    """
    w34 = jnp.concatenate([params["w3"], params["w4"]], axis=1)   # [256, 2*out]
    b34 = jnp.concatenate([params["b3"], params["b4"]], axis=1)   # [1,   2*out]
    return {
        "w1": params["w1"], "b1": params["b1"],
        "w2": params["w2"], "b2": params["b2"],
        "w34": w34, "b34": b34,
    }


def init_params(key, latent_dim, output_dim, hidden_sizes=(256, 128)):
    """Deterministic init matching PyTorch Linear default (uniform +/- 1/sqrt(fan_in)).

    Module layer sizes (after the insert/reverse dance):
      [latent_dim, hidden_sizes[1], hidden_sizes[0], output_dim]
      -> Linear(latent_dim, 128), Linear(128, 256), Linear(256, out) x2
    Weights stored pre-transposed as [in, out]; biases as [1, out].
    """
    sizes = [latent_dim, hidden_sizes[1], hidden_sizes[0], output_dim]
    dims = [
        (sizes[0], sizes[1]),  # w1
        (sizes[1], sizes[2]),  # w2
        (sizes[2], sizes[3]),  # w3 (mu head)
        (sizes[2], sizes[3]),  # w4 (log_var head)
    ]
    params = {}
    keys = jax.random.split(key, 2 * len(dims))
    for i, (fan_in, fan_out) in enumerate(dims):
        bound = 1.0 / (fan_in ** 0.5)
        w = jax.random.uniform(keys[2 * i], (fan_in, fan_out),
                               minval=-bound, maxval=bound, dtype=jnp.float32)
        b = jax.random.uniform(keys[2 * i + 1], (1, fan_out),
                               minval=-bound, maxval=bound, dtype=jnp.float32)
        params[f"w{i + 1}"] = w
        params[f"b{i + 1}"] = b
    return params


def _reference_forward(x, params):
    """Pure-JAX reference mirroring the PyTorch forward."""
    h = jnp.maximum(x @ params["w1"] + params["b1"], 0.0)
    h = jnp.maximum(h @ params["w2"] + params["b2"], 0.0)
    mu = h @ params["w3"] + params["b3"]
    lv = h @ params["w4"] + params["b4"]
    return mu, lv


if __name__ == "__main__":
    batch = 8
    latent_dim = 8
    output_dim = 32

    key = jax.random.PRNGKey(0)
    k_x, k_p = jax.random.split(key)

    x = jax.random.normal(k_x, (batch, latent_dim), dtype=jnp.float32)
    params = init_params(k_p, latent_dim, output_dim)
    prepared = prepare_decoder_params(params)   # head fusion hoisted out of the forward

    mu, log_var = variational_decoder_forward(x, prepared)
    jax.block_until_ready((mu, log_var))

    mu_ref, lv_ref = _reference_forward(x, params)
    assert mu.shape == (batch, output_dim) and log_var.shape == (batch, output_dim)
    assert jnp.allclose(mu, mu_ref, atol=1e-5), "mu mismatch vs reference"
    assert jnp.allclose(log_var, lv_ref, atol=1e-5), "log_var mismatch vs reference"

    # Non-multiple-of-tile batch: exercises the masked partial last block AND the
    # >=2-grid-step (megacore) path (37 rows -> tile 24, 2 steps, last step partial).
    x2 = jax.random.normal(k_x, (37, latent_dim), dtype=jnp.float32)
    mu2, lv2 = variational_decoder_forward(x2, prepared)
    jax.block_until_ready((mu2, lv2))
    mu2_ref, lv2_ref = _reference_forward(x2, params)
    assert mu2.shape == (37, output_dim) and lv2.shape == (37, output_dim)
    assert jnp.allclose(mu2, mu2_ref, atol=1e-5), "mu mismatch (partial last block)"
    assert jnp.allclose(lv2, lv2_ref, atol=1e-5), "log_var mismatch (partial last block)"

    print("KERNEL_OK")
</pallas_src>

<mosaic_0001>
module attributes {stable_mosaic.version = 11 : i64} {
  func.func @_decoder_kernel(%arg0: i32, %arg1: memref<8x8xf32, #tpu.memory_space<vmem>>, %arg2: memref<8x128xf32, #tpu.memory_space<vmem>>, %arg3: memref<1x128xf32, #tpu.memory_space<vmem>>, %arg4: memref<128x256xf32, #tpu.memory_space<vmem>>, %arg5: memref<1x256xf32, #tpu.memory_space<vmem>>, %arg6: memref<256x64xf32, #tpu.memory_space<vmem>>, %arg7: memref<1x64xf32, #tpu.memory_space<vmem>>, %arg8: memref<8x32xf32, #tpu.memory_space<vmem>>, %arg9: memref<8x32xf32, #tpu.memory_space<vmem>>) attributes {dimension_semantics = [#tpu.dimension_semantics<parallel>], iteration_bounds = array<i64: 1>, scalar_prefetch = 0 : i64, scratch_operands = 0 : i64, tpu.core_type = #tpu.core_type<tc>, window_params = [{transform_indices = @transform_0, window_bounds = array<i64: 8, 8>}, {pipeline_mode = #tpu.pipeline_mode<synchronous>, transform_indices = @transform_1, window_bounds = array<i64: 8, 128>}, {pipeline_mode = #tpu.pipeline_mode<synchronous>, transform_indices = @transform_2, window_bounds = array<i64: 1, 128>}, {pipeline_mode = #tpu.pipeline_mode<synchronous>, transform_indices = @transform_3, window_bounds = array<i64: 128, 256>}, {pipeline_mode = #tpu.pipeline_mode<synchronous>, transform_indices = @transform_4, window_bounds = array<i64: 1, 256>}, {pipeline_mode = #tpu.pipeline_mode<synchronous>, transform_indices = @transform_5, window_bounds = array<i64: 256, 64>}, {pipeline_mode = #tpu.pipeline_mode<synchronous>, transform_indices = @transform_6, window_bounds = array<i64: 1, 64>}, {transform_indices = @transform_7, window_bounds = array<i64: 8, 32>}, {transform_indices = @transform_8, window_bounds = array<i64: 8, 32>}]} {
    %c0 = arith.constant 0 : index
    %c0_0 = arith.constant 0 : index
    %0 = vector.load %arg1[%c0, %c0_0] : memref<8x8xf32, #tpu.memory_space<vmem>>, vector<8x8xf32>
    %c0_1 = arith.constant 0 : index
    %c0_2 = arith.constant 0 : index
    %1 = vector.load %arg2[%c0_1, %c0_2] : memref<8x128xf32, #tpu.memory_space<vmem>>, vector<8x128xf32>
    %cst = arith.constant dense<0.000000e+00> : vector<8x128xf32>
    %2 = tpu.matmul %0, %1, %cst {dimension_numbers = #tpu.dot_dimension_numbers<[1], [0], [0], [1], [0, 0, 1, 1], [], []>} : vector<8x8xf32>, vector<8x128xf32>, vector<8x128xf32> -> vector<8x128xf32>
    %c0_3 = arith.constant 0 : index
    %c0_4 = arith.constant 0 : index
    %3 = vector.load %arg3[%c0_3, %c0_4] : memref<1x128xf32, #tpu.memory_space<vmem>>, vector<1x128xf32>
    %4 = vector.broadcast %3 : vector<1x128xf32> to vector<8x128xf32>
    %5 = arith.addf %2, %4 : vector<8x128xf32>
    %cst_5 = arith.constant 0.000000e+00 : f32
    %6 = vector.broadcast %cst_5 : f32 to vector<8x128xf32>
    %7 = arith.maximumf %5, %6 : vector<8x128xf32>
    %c0_6 = arith.constant 0 : index
    %c0_7 = arith.constant 0 : index
    %8 = vector.load %arg4[%c0_6, %c0_7] : memref<128x256xf32, #tpu.memory_space<vmem>>, vector<128x256xf32>
    %cst_8 = arith.constant dense<0.000000e+00> : vector<8x256xf32>
    %9 = tpu.matmul %7, %8, %cst_8 {dimension_numbers = #tpu.dot_dimension_numbers<[1], [0], [0], [1], [0, 0, 1, 1], [], []>} : vector<8x128xf32>, vector<128x256xf32>, vector<8x256xf32> -> vector<8x256xf32>
    %c0_9 = arith.constant 0 : index
    %c0_10 = arith.constant 0 : index
    %10 = vector.load %arg5[%c0_9, %c0_10] : memref<1x256xf32, #tpu.memory_space<vmem>>, vector<1x256xf32>
    %11 = vector.broadcast %10 : vector<1x256xf32> to vector<8x256xf32>
    %12 = arith.addf %9, %11 : vector<8x256xf32>
    %cst_11 = arith.constant 0.000000e+00 : f32
    %13 = vector.broadcast %cst_11 : f32 to vector<8x256xf32>
    %14 = arith.maximumf %12, %13 : vector<8x256xf32>
    %c0_12 = arith.constant 0 : index
    %c0_13 = arith.constant 0 : index
    %15 = vector.load %arg6[%c0_12, %c0_13] : memref<256x64xf32, #tpu.memory_space<vmem>>, vector<256x64xf32>
    %cst_14 = arith.constant dense<0.000000e+00> : vector<8x64xf32>
    %16 = tpu.matmul %14, %15, %cst_14 {dimension_numbers = #tpu.dot_dimension_numbers<[1], [0], [0], [1], [0, 0, 1, 1], [], []>} : vector<8x256xf32>, vector<256x64xf32>, vector<8x64xf32> -> vector<8x64xf32>
    %c0_15 = arith.constant 0 : index
    %c0_16 = arith.constant 0 : index
    %17 = vector.load %arg7[%c0_15, %c0_16] : memref<1x64xf32, #tpu.memory_space<vmem>>, vector<1x64xf32>
    %18 = vector.broadcast %17 : vector<1x64xf32> to vector<8x64xf32>
    %19 = arith.addf %16, %18 : vector<8x64xf32>
    %20 = vector.extract_strided_slice %19 {offsets = [0, 0], sizes = [8, 32], strides = [1, 1]} : vector<8x64xf32> to vector<8x32xf32>
    %c0_17 = arith.constant 0 : index
    %c0_18 = arith.constant 0 : index
    %21 = vector.load %arg8[%c0_17, %c0_18] : memref<8x32xf32, #tpu.memory_space<vmem>>, vector<8x32xf32>
    tpu.vector_store %arg8[%c0_17, %c0_18], %20 {strides = array<i32>} : memref<8x32xf32, #tpu.memory_space<vmem>>, vector<8x32xf32>,
    %22 = vector.extract_strided_slice %19 {offsets = [0, 32], sizes = [8, 32], strides = [1, 1]} : vector<8x64xf32> to vector<8x32xf32>
    %c0_19 = arith.constant 0 : index
    %c0_20 = arith.constant 0 : index
    %23 = vector.load %arg9[%c0_19, %c0_20] : memref<8x32xf32, #tpu.memory_space<vmem>>, vector<8x32xf32>
    tpu.vector_store %arg9[%c0_19, %c0_20], %22 {strides = array<i32>} : memref<8x32xf32, #tpu.memory_space<vmem>>, vector<8x32xf32>,
    return
  }
  func.func @transform_0(%arg0: i32) -> (i32, i32) {
    %c0_i32 = arith.constant 0 : i32
    %c0_i32_0 = arith.constant 0 : i32
    return %arg0, %c0_i32 : i32, i32
  }
  func.func @transform_1(%arg0: i32) -> (i32, i32) {
    %c0_i32 = arith.constant 0 : i32
    %c0_i32_0 = arith.constant 0 : i32
    %c0_i32_1 = arith.constant 0 : i32
    return %c0_i32, %c0_i32_0 : i32, i32
  }
  func.func @transform_2(%arg0: i32) -> (i32, i32) {
    %c0_i32 = arith.constant 0 : i32
    %c0_i32_0 = arith.constant 0 : i32
    %c0_i32_1 = arith.constant 0 : i32
    return %c0_i32, %c0_i32_0 : i32, i32
  }
  func.func @transform_3(%arg0: i32) -> (i32, i32) {
    %c0_i32 = arith.constant 0 : i32
    %c0_i32_0 = arith.constant 0 : i32
    %c0_i32_1 = arith.constant 0 : i32
    return %c0_i32, %c0_i32_0 : i32, i32
  }
  func.func @transform_4(%arg0: i32) -> (i32, i32) {
    %c0_i32 = arith.constant 0 : i32
    %c0_i32_0 = arith.constant 0 : i32
    %c0_i32_1 = arith.constant 0 : i32
    return %c0_i32, %c0_i32_0 : i32, i32
  }
  func.func @transform_5(%arg0: i32) -> (i32, i32) {
    %c0_i32 = arith.constant 0 : i32
    %c0_i32_0 = arith.constant 0 : i32
    %c0_i32_1 = arith.constant 0 : i32
    return %c0_i32, %c0_i32_0 : i32, i32
  }
  func.func @transform_6(%arg0: i32) -> (i32, i32) {
    %c0_i32 = arith.constant 0 : i32
    %c0_i32_0 = arith.constant 0 : i32
    %c0_i32_1 = arith.constant 0 : i32
    return %c0_i32, %c0_i32_0 : i32, i32
  }
  func.func @transform_7(%arg0: i32) -> (i32, i32) {
    %c0_i32 = arith.constant 0 : i32
    %c0_i32_0 = arith.constant 0 : i32
    return %arg0, %c0_i32 : i32, i32
  }
  func.func @transform_8(%arg0: i32) -> (i32, i32) {
    %c0_i32 = arith.constant 0 : i32
    %c0_i32_0 = arith.constant 0 : i32
    return %arg0, %c0_i32 : i32, i32
  }
}

</mosaic_0001>

<llo_original>
// kernel: variational_decoder_forward.1
$region0: #{variational_decoder_forward.1}
  #allocation0 [shape = 'u32[]', space=smem, size = 0x4, offset = 0x4, fixed_abs, tag = 'smem constant byte address 0x4 - core index']
  #allocation1 [shape = 'u32[144,128]{1,0:T(1,128)}', space=vmem, size = 0x12000, scoped, tag = 'internal scratch']
  %s0 = inlined_call_operand.vmem [shape: f32[8,8], index: 0, kind: input, shape index: {}]
  %s1 = inlined_call_operand.vmem [shape: f32[8,128], index: 1, kind: input, shape index: {}]
  %s2 = inlined_call_operand.vmem [shape: f32[1,128], index: 2, kind: input, shape index: {}]
  %s3 = inlined_call_operand.vmem [shape: f32[128,256], index: 3, kind: input, shape index: {}]
  %s4 = inlined_call_operand.vmem [shape: f32[1,256], index: 4, kind: input, shape index: {}]
  %s5 = inlined_call_operand.vmem [shape: f32[256,64], index: 5, kind: input, shape index: {}]
  %s6 = inlined_call_operand.vmem [shape: f32[1,64], index: 6, kind: input, shape index: {}]
  %s7 = inlined_call_operand.hbm [shape: f32[8,32], index: 7, kind: output, shape index: {0}]
  %s8 = inlined_call_operand.hbm [shape: f32[8,32], index: 8, kind: output, shape index: {1}]
  %9 = xla_tuple %s7, %s8
  %s10 = sld [smem:[#allocation0]]
  $region46: #{variational_decoder_forward.1} parent=0
    _
  %s12 = ssub.s32 1, %s10
  %s13 = scalar_select 0, %s12, %s10
  $region1: #{variational_decoder_forward.1} parent=0
    #allocation2 [shape = 'u8[4096]{0}', space=vmem, size = 0x1000, scoped, tag = 'output window, operand 0, single buffered']
    #allocation3 [shape = 's32[1]{0}', space=sflag, size = 0x4, scoped, tag = 'scoped memory for variational_decoder_forward.1']
    #allocation4 [shape = 'u8[4096]{0}', space=vmem, size = 0x1000, scoped, tag = 'output window, operand 1, single buffered']
    #allocation5 [shape = 's32[1]{0}', space=sflag, size = 0x4, scoped, tag = 'scoped memory for variational_decoder_forward.1']
    %14 = vsyncpa [#allocation3], 0
    %15 = vsyncpa [#allocation5], 0
    // Predicated region
    $region2: #{variational_decoder_forward.1} parent=1 // pred_check
      _
    $region3: #{variational_decoder_forward.1} parent=1 // pred_check_branch
      %17 = sbr.rel (0) target = $region5
    $region4: #{variational_decoder_forward.1} parent=1 // pred_region
      _
    $region5: #{variational_decoder_forward.1} parent=1 // pred_fallthru
      _
    // Predicated region
    $region6: #{variational_decoder_forward.1} parent=1 // pred_check
      _
    $region7: #{variational_decoder_forward.1} parent=1 // pred_check_branch
      %19 = sbr.rel (0) target = $region9
    $region8: #{variational_decoder_forward.1} parent=1 // pred_region
      _
    $region9: #{variational_decoder_forward.1} parent=1 // pred_fallthru
      _
    // Predicated region
    $region10: #{variational_decoder_forward.1} parent=1 // pred_check
      _
    $region11: #{variational_decoder_forward.1} parent=1 // pred_check_branch
      %21 = sbr.rel (0) target = $region13
    $region12: #{variational_decoder_forward.1} parent=1 // pred_region
      _
    $region13: #{variational_decoder_forward.1} parent=1 // pred_fallthru
      _
    // Predicated region
    $region14: #{variational_decoder_forward.1} parent=1 // pred_check
      _
    $region15: #{variational_decoder_forward.1} parent=1 // pred_check_branch
      %23 = sbr.rel (0) target = $region17
    $region16: #{variational_decoder_forward.1} parent=1 // pred_region
      _
    $region17: #{variational_decoder_forward.1} parent=1 // pred_fallthru
      _
    // Predicated region
    $region18: #{variational_decoder_forward.1} parent=1 // pred_check
      _
    $region19: #{variational_decoder_forward.1} parent=1 // pred_check_branch
      %25 = sbr.rel (0) target = $region21
    $region20: #{variational_decoder_forward.1} parent=1 // pred_region
      _
    $region21: #{variational_decoder_forward.1} parent=1 // pred_fallthru
      _
    // Predicated region
    $region22: #{variational_decoder_forward.1} parent=1 // pred_check
      _
    $region23: #{variational_decoder_forward.1} parent=1 // pred_check_branch
      %27 = sbr.rel (0) target = $region25
    $region24: #{variational_decoder_forward.1} parent=1 // pred_region
      _
    $region25: #{variational_decoder_forward.1} parent=1 // pred_fallthru
      _
    // Predicated region
    $region26: #{variational_decoder_forward.1} parent=1 // pred_check
      _
    $region27: #{variational_decoder_forward.1} parent=1 // pred_check_branch
      %29 = sbr.rel (0) target = $region29
    $region28: #{variational_decoder_forward.1} parent=1 // pred_region
      _
    $region29: #{variational_decoder_forward.1} parent=1 // pred_fallthru
      _
    %v30 = vld [vmem:[%s0] sm:$0xff]
    %v31 = vld [vmem:[%s1] sm:$0xff]
    %v32 = vld [vmem:[%s2] sm:$0x1]
    %v34 = vlaneseq
    %v35 = vshrl.u32 %v34, 7
    %v36 = vsub.s32 0, %v35
    %v37 = vrot.slane %v32, %v36
    %vm39 = vcmask 64512
    %v41 = vsel %vm39, %v30, 0
    %43 = vmatprep.subr.mxu0 0.0
    %44 = vmatpush1.msra.mxu0 %v31
    %45 = vmatprep.subr.mxu0 0.0
    %46 = vmatpush1.msra.mxu0 0.0
    %47 = vmatprep.subr.mxu0 0.0
    %48 = vmatpush1.msra.mxu0 0.0
    %49 = vmatprep.subr.mxu0 0.0
    %50 = vmatpush1.msra.mxu0 0.0
    %51 = vmatprep.subr.mxu0 0.0
    %52 = vmatpush1.msra.mxu0 0.0
    %53 = vmatprep.subr.mxu0 0.0
    %54 = vmatpush1.msra.mxu0 0.0
    %55 = vmatprep.subr.mxu0 0.0
    %56 = vmatpush1.msra.mxu0 0.0
    %57 = vmatprep.subr.mxu0 0.0
    %58 = vmatpush1.msra.mxu0 0.0
    %59 = vmatprep.subr.mxu0 0.0
    %60 = vmatpush1.msra.mxu0 0.0
    %61 = vmatprep.subr.mxu0 0.0
    %62 = vmatpush1.msra.mxu0 0.0
    %63 = vmatprep.subr.mxu0 0.0
    %64 = vmatpush1.msra.mxu0 0.0
    %65 = vmatprep.subr.mxu0 0.0
    %66 = vmatpush1.msra.mxu0 0.0
    %67 = vmatprep.subr.mxu0 0.0
    %68 = vmatpush1.msra.mxu0 0.0
    %69 = vmatprep.subr.mxu0 0.0
    %70 = vmatpush1.msra.mxu0 0.0
    %71 = vmatprep.subr.mxu0 0.0
    %72 = vmatpush1.msra.mxu0 0.0
    %73 = vmatprep.subr.mxu0 0.0
    %74 = vmatpush1.msra.mxu0 0.0
    %75 = vmatprep.subr.mxu0 0.0
    %76 = vmatpush1.msra.mxu0 0.0
    %77 = vmatprep.subr.mxu0 0.0
    %78 = vmatpush1.msra.mxu0 0.0
    %79 = vmatprep.subr.mxu0 0.0
    %80 = vmatpush1.msra.mxu0 0.0
    %81 = vmatprep.subr.mxu0 0.0
    %82 = vmatpush1.msra.mxu0 0.0
    %83 = vmatprep.subr.mxu0 0.0
    %84 = vmatpush1.msra.mxu0 0.0
    %85 = vmatprep.subr.mxu0 0.0
    %86 = vmatpush1.msra.mxu0 0.0
    %87 = vmatprep.subr.mxu0 0.0
    %88 = vmatpush1.msra.mxu0 0.0
    %89 = vmatprep.subr.mxu0 0.0
    %90 = vmatpush1.msra.mxu0 0.0
    %91 = vmatprep.subr.mxu0 0.0
    %92 = vmatpush1.msra.mxu0 0.0
    %93 = vmatprep.subr.mxu0 0.0
    %94 = vmatpush1.msra.mxu0 0.0
    %95 = vmatprep.subr.mxu0 0.0
    %96 = vmatpush1.msra.mxu0 0.0
    %97 = vmatprep.subr.mxu0 0.0
    %98 = vmatpush1.msra.mxu0 0.0
    %99 = vmatprep.subr.mxu0 0.0
    %100 = vmatpush1.msra.mxu0 0.0
    %101 = vmatprep.subr.mxu0 0.0
    %102 = vmatpush1.msra.mxu0 0.0
    %103 = vmatprep.subr.mxu0 0.0
    %104 = vmatpush1.msra.mxu0 0.0
    %105 = vmatprep.subr.mxu0 0.0
    %106 = vmatpush1.msra.mxu0 0.0
    %107 = vmatprep.mubr.f32.mxu0 0.0
    %108 = vmatmul.mubr.f32.gmra.mrb[0].mxu0 %v41
    %v109 = vpop.f32.mrb[0].mxu0
    %v110 = vadd.f32 %v37, %v109
    %v111 = vpop.f32.mrb[0].mxu0
    %112 = vdwg.mxu0
    %v113 = vmax.f32 %v110, 0.0
    %v114 = vld [vmem:[%s3] sm:$0xff]
    %v115 = vld [vmem:[%s3 + $0x8] sm:$0xff]
    %v116 = vld [vmem:[%s3 + $0x10] sm:$0xff]
    %v117 = vld [vmem:[%s3 + $0x18] sm:$0xff]
    %v118 = vld [vmem:[%s3 + $0x20] sm:$0xff]
    %v119 = vld [vmem:[%s3 + $0x28] sm:$0xff]
    %v120 = vld [vmem:[%s3 + $0x30] sm:$0xff]
    %v121 = vld [vmem:[%s3 + $0x38] sm:$0xff]
    %v122 = vld [vmem:[%s3 + $0x40] sm:$0xff]
    %v123 = vld [vmem:[%s3 + $0x48] sm:$0xff]
    %v124 = vld [vmem:[%s3 + $0x50] sm:$0xff]
    %v125 = vld [vmem:[%s3 + $0x58] sm:$0xff]
    %v126 = vld [vmem:[%s3 + $0x60] sm:$0xff]
    %v127 = vld [vmem:[%s3 + $0x68] sm:$0xff]
    %v128 = vld [vmem:[%s3 + $0x70] sm:$0xff]
    %v129 = vld [vmem:[%s3 + $0x78] sm:$0xff]
    %v130 = vld [vmem:[%s3 + $0x80] sm:$0xff]
    %v131 = vld [vmem:[%s3 + $0x88] sm:$0xff]
    %v132 = vld [vmem:[%s3 + $0x90] sm:$0xff]
    %v133 = vld [vmem:[%s3 + $0x98] sm:$0xff]
    %v134 = vld [vmem:[%s3 + $0xa0] sm:$0xff]
    %v135 = vld [vmem:[%s3 + $0xa8] sm:$0xff]
    %v136 = vld [vmem:[%s3 + $0xb0] sm:$0xff]
    %v137 = vld [vmem:[%s3 + $0xb8] sm:$0xff]
    %v138 = vld [vmem:[%s3 + $0xc0] sm:$0xff]
    %v139 = vld [vmem:[%s3 + $0xc8] sm:$0xff]
    %v140 = vld [vmem:[%s3 + $0xd0] sm:$0xff]
    %v141 = vld [vmem:[%s3 + $0xd8] sm:$0xff]
    %v142 = vld [vmem:[%s3 + $0xe0] sm:$0xff]
    %v143 = vld [vmem:[%s3 + $0xe8] sm:$0xff]
    %v144 = vld [vmem:[%s3 + $0xf0] sm:$0xff]
    %v145 = vld [vmem:[%s3 + $0xf8] sm:$0xff]
    %v146 = vld [vmem:[%s4] sm:$0x3]
    %v148 = vlaneseq
    %v149 = vshrl.u32 %v148, 7
    %v150 = vsub.s32 0, %v149
    %v151 = vrot.slane %v146, %v150
    %v152 = vlaneseq
    %v153 = vshrl.u32 %v152, 7
    %v154 = vsub.s32 1, %v153
    %v155 = vrot.slane %v146, %v154
    %158 = vmatprep.subr.mxu0 %v115
    %159 = vmatpush1.msra.mxu0 %v114
    %160 = vmatprep.subr.mxu0 %v117
    %161 = vmatpush1.msra.mxu0 %v116
    %162 = vmatprep.subr.mxu0 %v119
    %163 = vmatpush1.msra.mxu0 %v118
    %164 = vmatprep.subr.mxu0 %v121
    %165 = vmatpush1.msra.mxu0 %v120
    %166 = vmatprep.subr.mxu0 %v123
    %167 = vmatpush1.msra.mxu0 %v122
    %168 = vmatprep.subr.mxu0 %v125
    %169 = vmatpush1.msra.mxu0 %v124
    %170 = vmatprep.subr.mxu0 %v127
    %171 = vmatpush1.msra.mxu0 %v126
    %172 = vmatprep.subr.mxu0 %v129
    %173 = vmatpush1.msra.mxu0 %v128
    %174 = vmatprep.subr.mxu0 %v131
    %175 = vmatpush1.msra.mxu0 %v130
    %176 = vmatprep.subr.mxu0 %v133
    %177 = vmatpush1.msra.mxu0 %v132
    %178 = vmatprep.subr.mxu0 %v135
    %179 = vmatpush1.msra.mxu0 %v134
    %180 = vmatprep.subr.mxu0 %v137
    %181 = vmatpush1.msra.mxu0 %v136
    %182 = vmatprep.subr.mxu0 %v139
    %183 = vmatpush1.msra.mxu0 %v138
    %184 = vmatprep.subr.mxu0 %v141
    %185 = vmatpush1.msra.mxu0 %v140
    %186 = vmatprep.subr.mxu0 %v143
    %187 = vmatpush1.msra.mxu0 %v142
    %188 = vmatprep.subr.mxu0 %v145
    %189 = vmatpush1.msra.mxu0 %v144
    %190 = vmatprep.subr.mxu0 0.0
    %191 = vmatpush1.msra.mxu0 0.0
    %192 = vmatprep.subr.mxu0 0.0
    %193 = vmatpush1.msra.mxu0 0.0
    %194 = vmatprep.subr.mxu0 0.0
    %195 = vmatpush1.msra.mxu0 0.0
    %196 = vmatprep.subr.mxu0 0.0
    %197 = vmatpush1.msra.mxu0 0.0
    %198 = vmatprep.subr.mxu0 0.0
    %199 = vmatpush1.msra.mxu0 0.0
    %200 = vmatprep.subr.mxu0 0.0
    %201 = vmatpush1.msra.mxu0 0.0
    %202 = vmatprep.subr.mxu0 0.0
    %203 = vmatpush1.msra.mxu0 0.0
    %204 = vmatprep.subr.mxu0 0.0
    %205 = vmatpush1.msra.mxu0 0.0
    %206 = vmatprep.subr.mxu0 0.0
    %207 = vmatpush1.msra.mxu0 0.0
    %208 = vmatprep.subr.mxu0 0.0
    %209 = vmatpush1.msra.mxu0 0.0
    %210 = vmatprep.subr.mxu0 0.0
    %211 = vmatpush1.msra.mxu0 0.0
    %212 = vmatprep.subr.mxu0 0.0
    %213 = vmatpush1.msra.mxu0 0.0
    %214 = vmatprep.subr.mxu0 0.0
    %215 = vmatpush1.msra.mxu0 0.0
    %216 = vmatprep.subr.mxu0 0.0
    %217 = vmatpush1.msra.mxu0 0.0
    %218 = vmatprep.subr.mxu0 0.0
    %219 = vmatpush1.msra.mxu0 0.0
    %220 = vmatprep.subr.mxu0 0.0
    %221 = vmatpush1.msra.mxu0 0.0
    %222 = vmatprep.mubr.f32.mxu0 0.0
    %223 = vmatmul.mubr.f32.gmra.mrb[0].mxu0 %v113
    %v224 = vpop.f32.mrb[0].mxu0
    %v225 = vadd.f32 %v151, %v224
    %v226 = vpop.f32.mrb[0].mxu0
    %v227 = vadd.f32 %v155, %v226
    %228 = vdwg.mxu0
    %v229 = vmax.f32 %v225, 0.0
    %v230 = vmax.f32 %v227, 0.0
    %v231 = vld [vmem:[%s5] sm:$0xff]
    %v232 = vld [vmem:[%s5 + $0x8] sm:$0xff]
    %v233 = vld [vmem:[%s5 + $0x10] sm:$0xff]
    %v234 = vld [vmem:[%s5 + $0x18] sm:$0xff]
    %v235 = vld [vmem:[%s5 + $0x20] sm:$0xff]
    %v236 = vld [vmem:[%s5 + $0x28] sm:$0xff]
    %v237 = vld [vmem:[%s5 + $0x30] sm:$0xff]
    %v238 = vld [vmem:[%s5 + $0x38] sm:$0xff]
    %v239 = vld [vmem:[%s5 + $0x40] sm:$0xff]
    %v240 = vld [vmem:[%s5 + $0x48] sm:$0xff]
    %v241 = vld [vmem:[%s5 + $0x50] sm:$0xff]
    %v242 = vld [vmem:[%s5 + $0x58] sm:$0xff]
    %v243 = vld [vmem:[%s5 + $0x60] sm:$0xff]
    %v244 = vld [vmem:[%s5 + $0x68] sm:$0xff]
    %v245 = vld [vmem:[%s5 + $0x70] sm:$0xff]
    %v246 = vld [vmem:[%s5 + $0x78] sm:$0xff]
    %v247 = vld [vmem:[%s5 + $0x80] sm:$0xff]
    %v248 = vld [vmem:[%s5 + $0x88] sm:$0xff]
    %v249 = vld [vmem:[%s5 + $0x90] sm:$0xff]
    %v250 = vld [vmem:[%s5 + $0x98] sm:$0xff]
    %v251 = vld [vmem:[%s5 + $0xa0] sm:$0xff]
    %v252 = vld [vmem:[%s5 + $0xa8] sm:$0xff]
    %v253 = vld [vmem:[%s5 + $0xb0] sm:$0xff]
    %v254 = vld [vmem:[%s5 + $0xb8] sm:$0xff]
    %v255 = vld [vmem:[%s5 + $0xc0] sm:$0xff]
    %v256 = vld [vmem:[%s5 + $0xc8] sm:$0xff]
    %v257 = vld [vmem:[%s5 + $0xd0] sm:$0xff]
    %v258 = vld [vmem:[%s5 + $0xd8] sm:$0xff]
    %v259 = vld [vmem:[%s5 + $0xe0] sm:$0xff]
    %v260 = vld [vmem:[%s5 + $0xe8] sm:$0xff]
    %v261 = vld [vmem:[%s5 + $0xf0] sm:$0xff]
    %v262 = vld [vmem:[%s5 + $0xf8] sm:$0xff]
    %v263 = vld [vmem:[%s6] sm:$0x1]
    %v265 = vlaneseq
    %v266 = vshrl.u32 %v265, 7
    %v267 = vsub.s32 0, %v266
    %v268 = vrot.slane %v263, %v267
    %270 = vmatprep.subr.mxu0 0.0
    %271 = vmatpush1.msra.mxu0 %v231
    %272 = vmatprep.subr.mxu0 0.0
    %273 = vmatpush1.msra.mxu0 %v232
    %274 = vmatprep.subr.mxu0 0.0
    %275 = vmatpush1.msra.mxu0 %v233
    %276 = vmatprep.subr.mxu0 0.0
    %277 = vmatpush1.msra.mxu0 %v234
    %278 = vmatprep.subr.mxu0 0.0
    %279 = vmatpush1.msra.mxu0 %v235
    %280 = vmatprep.subr.mxu0 0.0
    %281 = vmatpush1.msra.mxu0 %v236
    %282 = vmatprep.subr.mxu0 0.0
    %283 = vmatpush1.msra.mxu0 %v237
    %284 = vmatprep.subr.mxu0 0.0
    %285 = vmatpush1.msra.mxu0 %v238
    %286 = vmatprep.subr.mxu0 0.0
    %287 = vmatpush1.msra.mxu0 %v239
    %288 = vmatprep.subr.mxu0 0.0
    %289 = vmatpush1.msra.mxu0 %v240
    %290 = vmatprep.subr.mxu0 0.0
    %291 = vmatpush1.msra.mxu0 %v241
    %292 = vmatprep.subr.mxu0 0.0
    %293 = vmatpush1.msra.mxu0 %v242
    %294 = vmatprep.subr.mxu0 0.0
    %295 = vmatpush1.msra.mxu0 %v243
    %296 = vmatprep.subr.mxu0 0.0
    %297 = vmatpush1.msra.mxu0 %v244
    %298 = vmatprep.subr.mxu0 0.0
    %299 = vmatpush1.msra.mxu0 %v245
    %300 = vmatprep.subr.mxu0 0.0
    %301 = vmatpush1.msra.mxu0 %v246
    %302 = vmatprep.subr.mxu0 0.0
    %303 = vmatpush1.msra.mxu0 %v247
    %304 = vmatprep.subr.mxu0 0.0
    %305 = vmatpush1.msra.mxu0 %v248
    %306 = vmatprep.subr.mxu0 0.0
    %307 = vmatpush1.msra.mxu0 %v249
    %308 = vmatprep.subr.mxu0 0.0
    %309 = vmatpush1.msra.mxu0 %v250
    %310 = vmatprep.subr.mxu0 0.0
    %311 = vmatpush1.msra.mxu0 %v251
    %312 = vmatprep.subr.mxu0 0.0
    %313 = vmatpush1.msra.mxu0 %v252
    %314 = vmatprep.subr.mxu0 0.0
    %315 = vmatpush1.msra.mxu0 %v253
    %316 = vmatprep.subr.mxu0 0.0
    %317 = vmatpush1.msra.mxu0 %v254
    %318 = vmatprep.subr.mxu0 0.0
    %319 = vmatpush1.msra.mxu0 %v255
    %320 = vmatprep.subr.mxu0 0.0
    %321 = vmatpush1.msra.mxu0 %v256
    %322 = vmatprep.subr.mxu0 0.0
    %323 = vmatpush1.msra.mxu0 %v257
    %324 = vmatprep.subr.mxu0 0.0
    %325 = vmatpush1.msra.mxu0 %v258
    %326 = vmatprep.subr.mxu0 0.0
    %327 = vmatpush1.msra.mxu0 %v259
    %328 = vmatprep.subr.mxu0 0.0
    %329 = vmatpush1.msra.mxu0 %v260
    %330 = vmatprep.subr.mxu0 0.0
    %331 = vmatpush1.msra.mxu0 %v261
    %332 = vmatprep.subr.mxu0 0.0
    %333 = vmatpush1.msra.mxu0 %v262
    %334 = vmatprep.mubr.f32.mxu0 %v230
    %335 = vmatmul.mubr.f32.gmra.mrb[0].mxu0 %v229
    %v336 = vpop.f32.mrb[0].mxu0
    %v337 = vadd.f32 %v268, %v336
    %v338 = vpop.f32.mrb[0].mxu0
    %339 = vdwg.mxu0
    %vm340 = vcmask 261120
    %341 = vst.msk [vmem:[#allocation2] sm:$0xff] %vm340, %v337
    %343 = vrot.lane.b32.xlu0 %v337, 96
    %v344 = vpop.permute.xlu0 %343
    %346 = vst.msk [vmem:[#allocation4] sm:$0xff] %vm340, %v344
    // Predicated region
    $region30: #{variational_decoder_forward.1} parent=1 // pred_check
      _
    $region31: #{variational_decoder_forward.1} parent=1 // pred_check_branch
      %348 = sbr.rel (0) target = $region33
    $region32: #{variational_decoder_forward.1} parent=1 // pred_region
      %s350 = ssub.s32 128, 128
      %351 = vsyncadd [#allocation3], %s350
      %s353 = sshll.u32 [#allocation2], 4
      %s354 = int_to_ptr.vmem [resolvable:$true] %s353
      %356 = dma.vmem_to_hbm [thread:$0]  %s354, 128, %s7, [#allocation3]
    $region33: #{variational_decoder_forward.1} parent=1 // pred_fallthru
      _
    // Predicated region
    $region34: #{variational_decoder_forward.1} parent=1 // pred_check
      _
    $region35: #{variational_decoder_forward.1} parent=1 // pred_check_branch
      %358 = sbr.rel (0) target = $region37
    $region36: #{variational_decoder_forward.1} parent=1 // pred_region
      %s360 = ssub.s32 128, 128
      %361 = vsyncadd [#allocation5], %s360
      %s363 = sshll.u32 [#allocation4], 4
      %s364 = int_to_ptr.vmem [resolvable:$true] %s363
      %366 = dma.vmem_to_hbm [thread:$0]  %s364, 128, %s8, [#allocation5]
    $region37: #{variational_decoder_forward.1} parent=1 // pred_fallthru
      _
    // Predicated region
    $region38: #{variational_decoder_forward.1} parent=1 // pred_check
      _
    $region39: #{variational_decoder_forward.1} parent=1 // pred_check_branch
      %368 = sbr.rel (0) target = $region41
    $region40: #{variational_decoder_forward.1} parent=1 // pred_region
      %369 = dma.done [#allocation3], 128
    $region41: #{variational_decoder_forward.1} parent=1 // pred_fallthru
      _
    // Predicated region
    $region42: #{variational_decoder_forward.1} parent=1 // pred_check
      _
    $region43: #{variational_decoder_forward.1} parent=1 // pred_check_branch
      %371 = sbr.rel (0) target = $region45
    $region44: #{variational_decoder_forward.1} parent=1 // pred_region
      %372 = dma.done [#allocation5], 128
    $region45: #{variational_decoder_forward.1} parent=1 // pred_fallthru
      _
    %373 = vsyncpa [#allocation3], 1
    %374 = vsyncpa [#allocation5], 1

</llo_original>
